<compile_context>
chip_gen: v6e
topology: v6e:2x2x1
jax: 0.10.0
libtpu: 0.0.40
codegen_flags: <defaults>
</compile_context>

<pallas_src>
import math

import jax
import jax.numpy as jnp
from jax.experimental import pallas as pl
from jax.experimental.pallas import tpu as pltpu

D_MODEL = 32
VOCAB = 128
BATCH = 2
SEQ = 8
SCALE = math.sqrt(D_MODEL)


# ---------------------------------------------------------------------------
# Kernel: exact row gather from a VMEM-resident table + scale, one grid step
# ---------------------------------------------------------------------------
def _embedding_kernel(ids_ref, table_ref, o_ref):
    # ids_ref:   (BS,)   int32 token ids in SMEM (scalar-prefetched)
    # table_ref: (V, D)  f32 embedding table, fully VMEM-resident
    # o_ref:     (BS, D) f32 scaled embeddings (one VMEM block, one HBM writeback)
    bs = o_ref.shape[0]
    vocab = table_ref.shape[0]
    for t in range(bs):                                  # static unrolled loop (BS=16)
        tok = ids_ref[t]                                 # scalar read from SMEM
        pl.debug_check((tok >= 0) & (tok < vocab),
                       "token id out of range for embedding table")
        row = table_ref[pl.ds(tok, 1), :]                # (1, D) exact row gather
        o_ref[pl.ds(t, 1), :] = row * SCALE


def input_embeddings(ids, table):
    """ids: (B, S) int32, table: (vocab, d_model) f32 -> (B, S, d_model) f32."""
    B, S = ids.shape
    V, D = table.shape
    BS = B * S
    out = pl.pallas_call(
        _embedding_kernel,
        out_shape=jax.ShapeDtypeStruct((BS, D), table.dtype),
        grid_spec=pltpu.PrefetchScalarGridSpec(
            num_scalar_prefetch=1,                       # ids -> SMEM
            grid=(1,),                                   # whole problem in one step
            in_specs=[pl.BlockSpec((V, D), lambda i, ids_ref: (0, 0))],
            out_specs=pl.BlockSpec((BS, D), lambda i, ids_ref: (0, 0)),
        ),
        compiler_params=pltpu.CompilerParams(
            dimension_semantics=("arbitrary",)),
    )(ids.reshape(BS).astype(jnp.int32), table)
    return out.reshape(B, S, D)


# ---------------------------------------------------------------------------
# Pure-JAX reference (exact nn.Embedding semantics) for a correctness check
# ---------------------------------------------------------------------------
def reference_forward(ids, table):
    return table[ids] * SCALE


if __name__ == "__main__":
    root = jax.random.PRNGKey(0)
    k_tab, k_ids = jax.random.split(root)

    # No bf16 pre-rounding needed anymore: the row gather is bit-exact.
    table = jax.random.normal(k_tab, (VOCAB, D_MODEL), jnp.float32)
    ids = jax.random.randint(k_ids, (BATCH, SEQ), 0, VOCAB, dtype=jnp.int32)

    out = jax.block_until_ready(input_embeddings(ids, table))

    ref = reference_forward(ids, table)
    assert out.shape == (BATCH, SEQ, D_MODEL)
    assert out.dtype == jnp.float32
    assert jnp.allclose(out, ref, atol=1e-6, rtol=1e-6), "mismatch vs pure-JAX reference"

    print("KERNEL_OK")
</pallas_src>

<mosaic_0001>
module attributes {stable_mosaic.version = 11 : i64} {
  func.func @_embedding_kernel(%arg0: i32, %arg1: memref<16xi32, #tpu.memory_space<smem>>, %arg2: memref<128x32xf32, #tpu.memory_space<vmem>>, %arg3: memref<16x32xf32, #tpu.memory_space<vmem>>) attributes {dimension_semantics = [#tpu.dimension_semantics<arbitrary>], iteration_bounds = array<i64: 1>, scalar_prefetch = 1 : i64, scratch_operands = 0 : i64, tpu.core_type = #tpu.core_type<tc>, window_params = [{pipeline_mode = #tpu.pipeline_mode<synchronous>, transform_indices = @transform_0, window_bounds = array<i64: 128, 32>}, {pipeline_mode = #tpu.pipeline_mode<synchronous>, transform_indices = @transform_1, window_bounds = array<i64: 16, 32>}]} {
    %c0 = arith.constant 0 : index
    %0 = memref.load %arg1[%c0] : memref<16xi32, #tpu.memory_space<smem>>
    %c0_i32 = arith.constant 0 : i32
    %1 = arith.cmpi sge, %0, %c0_i32 : i32
    %c128_i32 = arith.constant 128 : i32
    %2 = arith.cmpi slt, %0, %c128_i32 : i32
    %3 = arith.andi %1, %2 : i1
    %true = arith.constant true
    %4 = arith.xori %3, %true : i1
    %false = arith.constant false
    %5 = arith.ori %false, %4 : i1
    %false_0 = arith.constant false
    %c1_i32 = arith.constant 1 : i32
    %c-1_i32 = arith.constant -1 : i32
    %6 = arith.select %false_0, %c-1_i32, %c1_i32 : i32
    %7 = arith.index_cast %0 : i32 to index
    %c0_1 = arith.constant 0 : index
    %8 = vector.load %arg2[%7, %c0_1] : memref<128x32xf32, #tpu.memory_space<vmem>>, vector<1x32xf32>
    %cst = arith.constant 5.65685415 : f32
    %9 = vector.broadcast %cst : f32 to vector<1x32xf32>
    %10 = arith.mulf %8, %9 : vector<1x32xf32>
    %c0_2 = arith.constant 0 : index
    %c0_3 = arith.constant 0 : index
    %11 = vector.load %arg3[%c0_2, %c0_3] : memref<16x32xf32, #tpu.memory_space<vmem>>, vector<1x32xf32>
    tpu.vector_store %arg3[%c0_2, %c0_3], %10 {strides = array<i32>} : memref<16x32xf32, #tpu.memory_space<vmem>>, vector<1x32xf32>,
    %c1 = arith.constant 1 : index
    %12 = memref.load %arg1[%c1] : memref<16xi32, #tpu.memory_space<smem>>
    %c0_i32_4 = arith.constant 0 : i32
    %13 = arith.cmpi sge, %12, %c0_i32_4 : i32
    %c128_i32_5 = arith.constant 128 : i32
    %14 = arith.cmpi slt, %12, %c128_i32_5 : i32
    %15 = arith.andi %13, %14 : i1
    %true_6 = arith.constant true
    %16 = arith.xori %15, %true_6 : i1
    %false_7 = arith.constant false
    %17 = arith.ori %false_7, %16 : i1
    %false_8 = arith.constant false
    %c2_i32 = arith.constant 2 : i32
    %c-1_i32_9 = arith.constant -1 : i32
    %18 = arith.select %false_8, %c-1_i32_9, %c2_i32 : i32
    %19 = arith.index_cast %12 : i32 to index
    %c0_10 = arith.constant 0 : index
    %20 = vector.load %arg2[%19, %c0_10] : memref<128x32xf32, #tpu.memory_space<vmem>>, vector<1x32xf32>
    %cst_11 = arith.constant 5.65685415 : f32
    %21 = vector.broadcast %cst_11 : f32 to vector<1x32xf32>
    %22 = arith.mulf %20, %21 : vector<1x32xf32>
    %c1_12 = arith.constant 1 : index
    %c0_13 = arith.constant 0 : index
    %23 = vector.load %arg3[%c1_12, %c0_13] : memref<16x32xf32, #tpu.memory_space<vmem>>, vector<1x32xf32>
    tpu.vector_store %arg3[%c1_12, %c0_13], %22 {strides = array<i32>} : memref<16x32xf32, #tpu.memory_space<vmem>>, vector<1x32xf32>,
    %c2 = arith.constant 2 : index
    %24 = memref.load %arg1[%c2] : memref<16xi32, #tpu.memory_space<smem>>
    %c0_i32_14 = arith.constant 0 : i32
    %25 = arith.cmpi sge, %24, %c0_i32_14 : i32
    %c128_i32_15 = arith.constant 128 : i32
    %26 = arith.cmpi slt, %24, %c128_i32_15 : i32
    %27 = arith.andi %25, %26 : i1
    %true_16 = arith.constant true
    %28 = arith.xori %27, %true_16 : i1
    %false_17 = arith.constant false
    %29 = arith.ori %false_17, %28 : i1
    %false_18 = arith.constant false
    %c3_i32 = arith.constant 3 : i32
    %c-1_i32_19 = arith.constant -1 : i32
    %30 = arith.select %false_18, %c-1_i32_19, %c3_i32 : i32
    %31 = arith.index_cast %24 : i32 to index
    %c0_20 = arith.constant 0 : index
    %32 = vector.load %arg2[%31, %c0_20] : memref<128x32xf32, #tpu.memory_space<vmem>>, vector<1x32xf32>
    %cst_21 = arith.constant 5.65685415 : f32
    %33 = vector.broadcast %cst_21 : f32 to vector<1x32xf32>
    %34 = arith.mulf %32, %33 : vector<1x32xf32>
    %c2_22 = arith.constant 2 : index
    %c0_23 = arith.constant 0 : index
    %35 = vector.load %arg3[%c2_22, %c0_23] : memref<16x32xf32, #tpu.memory_space<vmem>>, vector<1x32xf32>
    tpu.vector_store %arg3[%c2_22, %c0_23], %34 {strides = array<i32>} : memref<16x32xf32, #tpu.memory_space<vmem>>, vector<1x32xf32>,
    %c3 = arith.constant 3 : index
    %36 = memref.load %arg1[%c3] : memref<16xi32, #tpu.memory_space<smem>>
    %c0_i32_24 = arith.constant 0 : i32
    %37 = arith.cmpi sge, %36, %c0_i32_24 : i32
    %c128_i32_25 = arith.constant 128 : i32
    %38 = arith.cmpi slt, %36, %c128_i32_25 : i32
    %39 = arith.andi %37, %38 : i1
    %true_26 = arith.constant true
    %40 = arith.xori %39, %true_26 : i1
    %false_27 = arith.constant false
    %41 = arith.ori %false_27, %40 : i1
    %false_28 = arith.constant false
    %c4_i32 = arith.constant 4 : i32
    %c-1_i32_29 = arith.constant -1 : i32
    %42 = arith.select %false_28, %c-1_i32_29, %c4_i32 : i32
    %43 = arith.index_cast %36 : i32 to index
    %c0_30 = arith.constant 0 : index
    %44 = vector.load %arg2[%43, %c0_30] : memref<128x32xf32, #tpu.memory_space<vmem>>, vector<1x32xf32>
    %cst_31 = arith.constant 5.65685415 : f32
    %45 = vector.broadcast %cst_31 : f32 to vector<1x32xf32>
    %46 = arith.mulf %44, %45 : vector<1x32xf32>
    %c3_32 = arith.constant 3 : index
    %c0_33 = arith.constant 0 : index
    %47 = vector.load %arg3[%c3_32, %c0_33] : memref<16x32xf32, #tpu.memory_space<vmem>>, vector<1x32xf32>
    tpu.vector_store %arg3[%c3_32, %c0_33], %46 {strides = array<i32>} : memref<16x32xf32, #tpu.memory_space<vmem>>, vector<1x32xf32>,
    %c4 = arith.constant 4 : index
    %48 = memref.load %arg1[%c4] : memref<16xi32, #tpu.memory_space<smem>>
    %c0_i32_34 = arith.constant 0 : i32
    %49 = arith.cmpi sge, %48, %c0_i32_34 : i32
    %c128_i32_35 = arith.constant 128 : i32
    %50 = arith.cmpi slt, %48, %c128_i32_35 : i32
    %51 = arith.andi %49, %50 : i1
    %true_36 = arith.constant true
    %52 = arith.xori %51, %true_36 : i1
    %false_37 = arith.constant false
    %53 = arith.ori %false_37, %52 : i1
    %false_38 = arith.constant false
    %c5_i32 = arith.constant 5 : i32
    %c-1_i32_39 = arith.constant -1 : i32
    %54 = arith.select %false_38, %c-1_i32_39, %c5_i32 : i32
    %55 = arith.index_cast %48 : i32 to index
    %c0_40 = arith.constant 0 : index
    %56 = vector.load %arg2[%55, %c0_40] : memref<128x32xf32, #tpu.memory_space<vmem>>, vector<1x32xf32>
    %cst_41 = arith.constant 5.65685415 : f32
    %57 = vector.broadcast %cst_41 : f32 to vector<1x32xf32>
    %58 = arith.mulf %56, %57 : vector<1x32xf32>
    %c4_42 = arith.constant 4 : index
    %c0_43 = arith.constant 0 : index
    %59 = vector.load %arg3[%c4_42, %c0_43] : memref<16x32xf32, #tpu.memory_space<vmem>>, vector<1x32xf32>
    tpu.vector_store %arg3[%c4_42, %c0_43], %58 {strides = array<i32>} : memref<16x32xf32, #tpu.memory_space<vmem>>, vector<1x32xf32>,
    %c5 = arith.constant 5 : index
    %60 = memref.load %arg1[%c5] : memref<16xi32, #tpu.memory_space<smem>>
    %c0_i32_44 = arith.constant 0 : i32
    %61 = arith.cmpi sge, %60, %c0_i32_44 : i32
    %c128_i32_45 = arith.constant 128 : i32
    %62 = arith.cmpi slt, %60, %c128_i32_45 : i32
    %63 = arith.andi %61, %62 : i1
    %true_46 = arith.constant true
    %64 = arith.xori %63, %true_46 : i1
    %false_47 = arith.constant false
    %65 = arith.ori %false_47, %64 : i1
    %false_48 = arith.constant false
    %c6_i32 = arith.constant 6 : i32
    %c-1_i32_49 = arith.constant -1 : i32
    %66 = arith.select %false_48, %c-1_i32_49, %c6_i32 : i32
    %67 = arith.index_cast %60 : i32 to index
    %c0_50 = arith.constant 0 : index
    %68 = vector.load %arg2[%67, %c0_50] : memref<128x32xf32, #tpu.memory_space<vmem>>, vector<1x32xf32>
    %cst_51 = arith.constant 5.65685415 : f32
    %69 = vector.broadcast %cst_51 : f32 to vector<1x32xf32>
    %70 = arith.mulf %68, %69 : vector<1x32xf32>
    %c5_52 = arith.constant 5 : index
    %c0_53 = arith.constant 0 : index
    %71 = vector.load %arg3[%c5_52, %c0_53] : memref<16x32xf32, #tpu.memory_space<vmem>>, vector<1x32xf32>
    tpu.vector_store %arg3[%c5_52, %c0_53], %70 {strides = array<i32>} : memref<16x32xf32, #tpu.memory_space<vmem>>, vector<1x32xf32>,
    %c6 = arith.constant 6 : index
    %72 = memref.load %arg1[%c6] : memref<16xi32, #tpu.memory_space<smem>>
    %c0_i32_54 = arith.constant 0 : i32
    %73 = arith.cmpi sge, %72, %c0_i32_54 : i32
    %c128_i32_55 = arith.constant 128 : i32
    %74 = arith.cmpi slt, %72, %c128_i32_55 : i32
    %75 = arith.andi %73, %74 : i1
    %true_56 = arith.constant true
    %76 = arith.xori %75, %true_56 : i1
    %false_57 = arith.constant false
    %77 = arith.ori %false_57, %76 : i1
    %false_58 = arith.constant false
    %c7_i32 = arith.constant 7 : i32
    %c-1_i32_59 = arith.constant -1 : i32
    %78 = arith.select %false_58, %c-1_i32_59, %c7_i32 : i32
    %79 = arith.index_cast %72 : i32 to index
    %c0_60 = arith.constant 0 : index
    %80 = vector.load %arg2[%79, %c0_60] : memref<128x32xf32, #tpu.memory_space<vmem>>, vector<1x32xf32>
    %cst_61 = arith.constant 5.65685415 : f32
    %81 = vector.broadcast %cst_61 : f32 to vector<1x32xf32>
    %82 = arith.mulf %80, %81 : vector<1x32xf32>
    %c6_62 = arith.constant 6 : index
    %c0_63 = arith.constant 0 : index
    %83 = vector.load %arg3[%c6_62, %c0_63] : memref<16x32xf32, #tpu.memory_space<vmem>>, vector<1x32xf32>
    tpu.vector_store %arg3[%c6_62, %c0_63], %82 {strides = array<i32>} : memref<16x32xf32, #tpu.memory_space<vmem>>, vector<1x32xf32>,
    %c7 = arith.constant 7 : index
    %84 = memref.load %arg1[%c7] : memref<16xi32, #tpu.memory_space<smem>>
    %c0_i32_64 = arith.constant 0 : i32
    %85 = arith.cmpi sge, %84, %c0_i32_64 : i32
    %c128_i32_65 = arith.constant 128 : i32
    %86 = arith.cmpi slt, %84, %c128_i32_65 : i32
    %87 = arith.andi %85, %86 : i1
    %true_66 = arith.constant true
    %88 = arith.xori %87, %true_66 : i1
    %false_67 = arith.constant false
    %89 = arith.ori %false_67, %88 : i1
    %false_68 = arith.constant false
    %c8_i32 = arith.constant 8 : i32
    %c-1_i32_69 = arith.constant -1 : i32
    %90 = arith.select %false_68, %c-1_i32_69, %c8_i32 : i32
    %91 = arith.index_cast %84 : i32 to index
    %c0_70 = arith.constant 0 : index
    %92 = vector.load %arg2[%91, %c0_70] : memref<128x32xf32, #tpu.memory_space<vmem>>, vector<1x32xf32>
    %cst_71 = arith.constant 5.65685415 : f32
    %93 = vector.broadcast %cst_71 : f32 to vector<1x32xf32>
    %94 = arith.mulf %92, %93 : vector<1x32xf32>
    %c7_72 = arith.constant 7 : index
    %c0_73 = arith.constant 0 : index
    %95 = vector.load %arg3[%c7_72, %c0_73] : memref<16x32xf32, #tpu.memory_space<vmem>>, vector<1x32xf32>
    tpu.vector_store %arg3[%c7_72, %c0_73], %94 {strides = array<i32>} : memref<16x32xf32, #tpu.memory_space<vmem>>, vector<1x32xf32>,
    %c8 = arith.constant 8 : index
    %96 = memref.load %arg1[%c8] : memref<16xi32, #tpu.memory_space<smem>>
    %c0_i32_74 = arith.constant 0 : i32
    %97 = arith.cmpi sge, %96, %c0_i32_74 : i32
    %c128_i32_75 = arith.constant 128 : i32
    %98 = arith.cmpi slt, %96, %c128_i32_75 : i32
    %99 = arith.andi %97, %98 : i1
    %true_76 = arith.constant true
    %100 = arith.xori %99, %true_76 : i1
    %false_77 = arith.constant false
    %101 = arith.ori %false_77, %100 : i1
    %false_78 = arith.constant false
    %c9_i32 = arith.constant 9 : i32
    %c-1_i32_79 = arith.constant -1 : i32
    %102 = arith.select %false_78, %c-1_i32_79, %c9_i32 : i32
    %103 = arith.index_cast %96 : i32 to index
    %c0_80 = arith.constant 0 : index
    %104 = vector.load %arg2[%103, %c0_80] : memref<128x32xf32, #tpu.memory_space<vmem>>, vector<1x32xf32>
    %cst_81 = arith.constant 5.65685415 : f32
    %105 = vector.broadcast %cst_81 : f32 to vector<1x32xf32>
    %106 = arith.mulf %104, %105 : vector<1x32xf32>
    %c8_82 = arith.constant 8 : index
    %c0_83 = arith.constant 0 : index
    %107 = vector.load %arg3[%c8_82, %c0_83] : memref<16x32xf32, #tpu.memory_space<vmem>>, vector<1x32xf32>
    tpu.vector_store %arg3[%c8_82, %c0_83], %106 {strides = array<i32>} : memref<16x32xf32, #tpu.memory_space<vmem>>, vector<1x32xf32>,
    %c9 = arith.constant 9 : index
    %108 = memref.load %arg1[%c9] : memref<16xi32, #tpu.memory_space<smem>>
    %c0_i32_84 = arith.constant 0 : i32
    %109 = arith.cmpi sge, %108, %c0_i32_84 : i32
    %c128_i32_85 = arith.constant 128 : i32
    %110 = arith.cmpi slt, %108, %c128_i32_85 : i32
    %111 = arith.andi %109, %110 : i1
    %true_86 = arith.constant true
    %112 = arith.xori %111, %true_86 : i1
    %false_87 = arith.constant false
    %113 = arith.ori %false_87, %112 : i1
    %false_88 = arith.constant false
    %c10_i32 = arith.constant 10 : i32
    %c-1_i32_89 = arith.constant -1 : i32
    %114 = arith.select %false_88, %c-1_i32_89, %c10_i32 : i32
    %115 = arith.index_cast %108 : i32 to index
    %c0_90 = arith.constant 0 : index
    %116 = vector.load %arg2[%115, %c0_90] : memref<128x32xf32, #tpu.memory_space<vmem>>, vector<1x32xf32>
    %cst_91 = arith.constant 5.65685415 : f32
    %117 = vector.broadcast %cst_91 : f32 to vector<1x32xf32>
    %118 = arith.mulf %116, %117 : vector<1x32xf32>
    %c9_92 = arith.constant 9 : index
    %c0_93 = arith.constant 0 : index
    %119 = vector.load %arg3[%c9_92, %c0_93] : memref<16x32xf32, #tpu.memory_space<vmem>>, vector<1x32xf32>
    tpu.vector_store %arg3[%c9_92, %c0_93], %118 {strides = array<i32>} : memref<16x32xf32, #tpu.memory_space<vmem>>, vector<1x32xf32>,
    %c10 = arith.constant 10 : index
    %120 = memref.load %arg1[%c10] : memref<16xi32, #tpu.memory_space<smem>>
    %c0_i32_94 = arith.constant 0 : i32
    %121 = arith.cmpi sge, %120, %c0_i32_94 : i32
    %c128_i32_95 = arith.constant 128 : i32
    %122 = arith.cmpi slt, %120, %c128_i32_95 : i32
    %123 = arith.andi %121, %122 : i1
    %true_96 = arith.constant true
    %124 = arith.xori %123, %true_96 : i1
    %false_97 = arith.constant false
    %125 = arith.ori %false_97, %124 : i1
    %false_98 = arith.constant false
    %c11_i32 = arith.constant 11 : i32
    %c-1_i32_99 = arith.constant -1 : i32
    %126 = arith.select %false_98, %c-1_i32_99, %c11_i32 : i32
    %127 = arith.index_cast %120 : i32 to index
    %c0_100 = arith.constant 0 : index
    %128 = vector.load %arg2[%127, %c0_100] : memref<128x32xf32, #tpu.memory_space<vmem>>, vector<1x32xf32>
    %cst_101 = arith.constant 5.65685415 : f32
    %129 = vector.broadcast %cst_101 : f32 to vector<1x32xf32>
    %130 = arith.mulf %128, %129 : vector<1x32xf32>
    %c10_102 = arith.constant 10 : index
    %c0_103 = arith.constant 0 : index
    %131 = vector.load %arg3[%c10_102, %c0_103] : memref<16x32xf32, #tpu.memory_space<vmem>>, vector<1x32xf32>
    tpu.vector_store %arg3[%c10_102, %c0_103], %130 {strides = array<i32>} : memref<16x32xf32, #tpu.memory_space<vmem>>, vector<1x32xf32>,
    %c11 = arith.constant 11 : index
    %132 = memref.load %arg1[%c11] : memref<16xi32, #tpu.memory_space<smem>>
    %c0_i32_104 = arith.constant 0 : i32
    %133 = arith.cmpi sge, %132, %c0_i32_104 : i32
    %c128_i32_105 = arith.constant 128 : i32
    %134 = arith.cmpi slt, %132, %c128_i32_105 : i32
    %135 = arith.andi %133, %134 : i1
    %true_106 = arith.constant true
    %136 = arith.xori %135, %true_106 : i1
    %false_107 = arith.constant false
    %137 = arith.ori %false_107, %136 : i1
    %false_108 = arith.constant false
    %c12_i32 = arith.constant 12 : i32
    %c-1_i32_109 = arith.constant -1 : i32
    %138 = arith.select %false_108, %c-1_i32_109, %c12_i32 : i32
    %139 = arith.index_cast %132 : i32 to index
    %c0_110 = arith.constant 0 : index
    %140 = vector.load %arg2[%139, %c0_110] : memref<128x32xf32, #tpu.memory_space<vmem>>, vector<1x32xf32>
    %cst_111 = arith.constant 5.65685415 : f32
    %141 = vector.broadcast %cst_111 : f32 to vector<1x32xf32>
    %142 = arith.mulf %140, %141 : vector<1x32xf32>
    %c11_112 = arith.constant 11 : index
    %c0_113 = arith.constant 0 : index
    %143 = vector.load %arg3[%c11_112, %c0_113] : memref<16x32xf32, #tpu.memory_space<vmem>>, vector<1x32xf32>
    tpu.vector_store %arg3[%c11_112, %c0_113], %142 {strides = array<i32>} : memref<16x32xf32, #tpu.memory_space<vmem>>, vector<1x32xf32>,
    %c12 = arith.constant 12 : index
    %144 = memref.load %arg1[%c12] : memref<16xi32, #tpu.memory_space<smem>>
    %c0_i32_114 = arith.constant 0 : i32
    %145 = arith.cmpi sge, %144, %c0_i32_114 : i32
    %c128_i32_115 = arith.constant 128 : i32
    %146 = arith.cmpi slt, %144, %c128_i32_115 : i32
    %147 = arith.andi %145, %146 : i1
    %true_116 = arith.constant true
    %148 = arith.xori %147, %true_116 : i1
    %false_117 = arith.constant false
    %149 = arith.ori %false_117, %148 : i1
    %false_118 = arith.constant false
    %c13_i32 = arith.constant 13 : i32
    %c-1_i32_119 = arith.constant -1 : i32
    %150 = arith.select %false_118, %c-1_i32_119, %c13_i32 : i32
    %151 = arith.index_cast %144 : i32 to index
    %c0_120 = arith.constant 0 : index
    %152 = vector.load %arg2[%151, %c0_120] : memref<128x32xf32, #tpu.memory_space<vmem>>, vector<1x32xf32>
    %cst_121 = arith.constant 5.65685415 : f32
    %153 = vector.broadcast %cst_121 : f32 to vector<1x32xf32>
    %154 = arith.mulf %152, %153 : vector<1x32xf32>
    %c12_122 = arith.constant 12 : index
    %c0_123 = arith.constant 0 : index
    %155 = vector.load %arg3[%c12_122, %c0_123] : memref<16x32xf32, #tpu.memory_space<vmem>>, vector<1x32xf32>
    tpu.vector_store %arg3[%c12_122, %c0_123], %154 {strides = array<i32>} : memref<16x32xf32, #tpu.memory_space<vmem>>, vector<1x32xf32>,
    %c13 = arith.constant 13 : index
    %156 = memref.load %arg1[%c13] : memref<16xi32, #tpu.memory_space<smem>>
    %c0_i32_124 = arith.constant 0 : i32
    %157 = arith.cmpi sge, %156, %c0_i32_124 : i32
    %c128_i32_125 = arith.constant 128 : i32
    %158 = arith.cmpi slt, %156, %c128_i32_125 : i32
    %159 = arith.andi %157, %158 : i1
    %true_126 = arith.constant true
    %160 = arith.xori %159, %true_126 : i1
    %false_127 = arith.constant false
    %161 = arith.ori %false_127, %160 : i1
    %false_128 = arith.constant false
    %c14_i32 = arith.constant 14 : i32
    %c-1_i32_129 = arith.constant -1 : i32
    %162 = arith.select %false_128, %c-1_i32_129, %c14_i32 : i32
    %163 = arith.index_cast %156 : i32 to index
    %c0_130 = arith.constant 0 : index
    %164 = vector.load %arg2[%163, %c0_130] : memref<128x32xf32, #tpu.memory_space<vmem>>, vector<1x32xf32>
    %cst_131 = arith.constant 5.65685415 : f32
    %165 = vector.broadcast %cst_131 : f32 to vector<1x32xf32>
    %166 = arith.mulf %164, %165 : vector<1x32xf32>
    %c13_132 = arith.constant 13 : index
    %c0_133 = arith.constant 0 : index
    %167 = vector.load %arg3[%c13_132, %c0_133] : memref<16x32xf32, #tpu.memory_space<vmem>>, vector<1x32xf32>
    tpu.vector_store %arg3[%c13_132, %c0_133], %166 {strides = array<i32>} : memref<16x32xf32, #tpu.memory_space<vmem>>, vector<1x32xf32>,
    %c14 = arith.constant 14 : index
    %168 = memref.load %arg1[%c14] : memref<16xi32, #tpu.memory_space<smem>>
    %c0_i32_134 = arith.constant 0 : i32
    %169 = arith.cmpi sge, %168, %c0_i32_134 : i32
    %c128_i32_135 = arith.constant 128 : i32
    %170 = arith.cmpi slt, %168, %c128_i32_135 : i32
    %171 = arith.andi %169, %170 : i1
    %true_136 = arith.constant true
    %172 = arith.xori %171, %true_136 : i1
    %false_137 = arith.constant false
    %173 = arith.ori %false_137, %172 : i1
    %false_138 = arith.constant false
    %c15_i32 = arith.constant 15 : i32
    %c-1_i32_139 = arith.constant -1 : i32
    %174 = arith.select %false_138, %c-1_i32_139, %c15_i32 : i32
    %175 = arith.index_cast %168 : i32 to index
    %c0_140 = arith.constant 0 : index
    %176 = vector.load %arg2[%175, %c0_140] : memref<128x32xf32, #tpu.memory_space<vmem>>, vector<1x32xf32>
    %cst_141 = arith.constant 5.65685415 : f32
    %177 = vector.broadcast %cst_141 : f32 to vector<1x32xf32>
    %178 = arith.mulf %176, %177 : vector<1x32xf32>
    %c14_142 = arith.constant 14 : index
    %c0_143 = arith.constant 0 : index
    %179 = vector.load %arg3[%c14_142, %c0_143] : memref<16x32xf32, #tpu.memory_space<vmem>>, vector<1x32xf32>
    tpu.vector_store %arg3[%c14_142, %c0_143], %178 {strides = array<i32>} : memref<16x32xf32, #tpu.memory_space<vmem>>, vector<1x32xf32>,
    %c15 = arith.constant 15 : index
    %180 = memref.load %arg1[%c15] : memref<16xi32, #tpu.memory_space<smem>>
    %c0_i32_144 = arith.constant 0 : i32
    %181 = arith.cmpi sge, %180, %c0_i32_144 : i32
    %c128_i32_145 = arith.constant 128 : i32
    %182 = arith.cmpi slt, %180, %c128_i32_145 : i32
    %183 = arith.andi %181, %182 : i1
    %true_146 = arith.constant true
    %184 = arith.xori %183, %true_146 : i1
    %false_147 = arith.constant false
    %185 = arith.ori %false_147, %184 : i1
    %false_148 = arith.constant false
    %c16_i32 = arith.constant 16 : i32
    %c-1_i32_149 = arith.constant -1 : i32
    %186 = arith.select %false_148, %c-1_i32_149, %c16_i32 : i32
    %187 = arith.index_cast %180 : i32 to index
    %c0_150 = arith.constant 0 : index
    %188 = vector.load %arg2[%187, %c0_150] : memref<128x32xf32, #tpu.memory_space<vmem>>, vector<1x32xf32>
    %cst_151 = arith.constant 5.65685415 : f32
    %189 = vector.broadcast %cst_151 : f32 to vector<1x32xf32>
    %190 = arith.mulf %188, %189 : vector<1x32xf32>
    %c15_152 = arith.constant 15 : index
    %c0_153 = arith.constant 0 : index
    %191 = vector.load %arg3[%c15_152, %c0_153] : memref<16x32xf32, #tpu.memory_space<vmem>>, vector<1x32xf32>
    tpu.vector_store %arg3[%c15_152, %c0_153], %190 {strides = array<i32>} : memref<16x32xf32, #tpu.memory_space<vmem>>, vector<1x32xf32>,
    return
  }
  func.func @transform_0(%arg0: i32, %arg1: memref<16xi32, #tpu.memory_space<smem>>) -> (i32, i32) {
    %c0_i32 = arith.constant 0 : i32
    %c0_i32_0 = arith.constant 0 : i32
    %c0_i32_1 = arith.constant 0 : i32
    return %c0_i32, %c0_i32_0 : i32, i32
  }
  func.func @transform_1(%arg0: i32, %arg1: memref<16xi32, #tpu.memory_space<smem>>) -> (i32, i32) {
    %c0_i32 = arith.constant 0 : i32
    %c0_i32_0 = arith.constant 0 : i32
    %c0_i32_1 = arith.constant 0 : i32
    return %c0_i32, %c0_i32_0 : i32, i32
  }
}

</mosaic_0001>

<llo_original>
// kernel: tpu_custom_call.1
$region0: #{tpu_custom_call.1}
  #allocation0 [shape = 'u32[]', space=smem, size = 0x4, offset = 0x4, fixed_abs, tag = 'smem constant byte address 0x4 - core index']
  #allocation1 [shape = 'u32[144,128]{1,0:T(1,128)}', space=vmem, size = 0x12000, scoped, tag = 'internal scratch']
  #allocation2 [shape = 's32[1]{0}', space=sflag, size = 0x4, scoped, tag = 'scoped memory for tpu_custom_call.1']
  #allocation3 [shape = 'u8[512]{0}', space=smem, size = 0x200, scoped, tag = 'prefetched SMEM operand 0']
  %s0 = inlined_call_operand.vmem [shape: s32[16], index: 0, kind: input, shape index: {}]
  %s1 = inlined_call_operand.vmem [shape: f32[128,32], index: 1, kind: input, shape index: {}]
  %s2 = inlined_call_operand.hbm [shape: f32[16,32], index: 2, kind: output, shape index: {}]
  %s3 = sld [smem:[#allocation0]]
  $region14: #{tpu_custom_call.1} parent=0
    _
  %s5 = ssub.s32 1, %s3
  %s6 = scalar_select 0, %s5, %s3
  %s7 = sshll.u32 %s0, 4
  %s8 = int_to_ptr.vmem [resolvable:$true] %s7
  %10 = dma.vmem_to_smem %s8, 16, [#allocation3], [#allocation2]
  %11 = dma.done [#allocation2], 16
  %12 = sfence
  $region1: #{tpu_custom_call.1} parent=0
    #allocation4 [shape = 'u8[8192]{0}', space=vmem, size = 0x2000, scoped, tag = 'output window, operand 0, single buffered']
    #allocation5 [shape = 's32[1]{0}', space=sflag, size = 0x4, scoped, tag = 'scoped memory for tpu_custom_call.1']
    %13 = vsyncpa [#allocation5], 0
    // Predicated region
    $region2: #{tpu_custom_call.1} parent=1 // pred_check
      _
    $region3: #{tpu_custom_call.1} parent=1 // pred_check_branch
      %15 = sbr.rel (0) target = $region5
    $region4: #{tpu_custom_call.1} parent=1 // pred_region
      _
    $region5: #{tpu_custom_call.1} parent=1 // pred_fallthru
      _
    %s16 = sld [smem:[#allocation3]]
    %s17 = scalar_lea.vmem %s1, %s16
    %v18 = vld [vmem:[%s17] sm:$0x1]
    %v19 = vmul.f32 %v18, 5.656854
    %vm20 = vcmask 253952
    %21 = vst.msk [vmem:[#allocation4] sm:$0x1] %vm20, %v19
    %s22 = sld [smem:[#allocation3 + $0x1]]
    %s23 = scalar_lea.vmem %s1, %s22
    %v24 = vld [vmem:[%s23] sm:$0x1]
    %v25 = vmul.f32 %v24, 5.656854
    %26 = vst.msk [vmem:[#allocation4 + $0x1] sm:$0x1] %vm20, %v25
    %s27 = sld [smem:[#allocation3 + $0x2]]
    %s28 = scalar_lea.vmem %s1, %s27
    %v29 = vld [vmem:[%s28] sm:$0x1]
    %v30 = vmul.f32 %v29, 5.656854
    %31 = vst.msk [vmem:[#allocation4 + $0x2] sm:$0x1] %vm20, %v30
    %s32 = sld [smem:[#allocation3 + $0x3]]
    %s33 = scalar_lea.vmem %s1, %s32
    %v34 = vld [vmem:[%s33] sm:$0x1]
    %v35 = vmul.f32 %v34, 5.656854
    %36 = vst.msk [vmem:[#allocation4 + $0x3] sm:$0x1] %vm20, %v35
    %s37 = sld [smem:[#allocation3 + $0x4]]
    %s38 = scalar_lea.vmem %s1, %s37
    %v39 = vld [vmem:[%s38] sm:$0x1]
    %v40 = vmul.f32 %v39, 5.656854
    %41 = vst.msk [vmem:[#allocation4 + $0x4] sm:$0x1] %vm20, %v40
    %s42 = sld [smem:[#allocation3 + $0x5]]
    %s43 = scalar_lea.vmem %s1, %s42
    %v44 = vld [vmem:[%s43] sm:$0x1]
    %v45 = vmul.f32 %v44, 5.656854
    %46 = vst.msk [vmem:[#allocation4 + $0x5] sm:$0x1] %vm20, %v45
    %s47 = sld [smem:[#allocation3 + $0x6]]
    %s48 = scalar_lea.vmem %s1, %s47
    %v49 = vld [vmem:[%s48] sm:$0x1]
    %v50 = vmul.f32 %v49, 5.656854
    %51 = vst.msk [vmem:[#allocation4 + $0x6] sm:$0x1] %vm20, %v50
    %s52 = sld [smem:[#allocation3 + $0x7]]
    %s53 = scalar_lea.vmem %s1, %s52
    %v54 = vld [vmem:[%s53] sm:$0x1]
    %v55 = vmul.f32 %v54, 5.656854
    %56 = vst.msk [vmem:[#allocation4 + $0x7] sm:$0x1] %vm20, %v55
    %s57 = sld [smem:[#allocation3 + $0x8]]
    %s58 = scalar_lea.vmem %s1, %s57
    %v59 = vld [vmem:[%s58] sm:$0x1]
    %v60 = vmul.f32 %v59, 5.656854
    %61 = vst.msk [vmem:[#allocation4 + $0x8] sm:$0x1] %vm20, %v60
    %s62 = sld [smem:[#allocation3 + $0x9]]
    %s63 = scalar_lea.vmem %s1, %s62
    %v64 = vld [vmem:[%s63] sm:$0x1]
    %v65 = vmul.f32 %v64, 5.656854
    %66 = vst.msk [vmem:[#allocation4 + $0x9] sm:$0x1] %vm20, %v65
    %s67 = sld [smem:[#allocation3 + $0xa]]
    %s68 = scalar_lea.vmem %s1, %s67
    %v69 = vld [vmem:[%s68] sm:$0x1]
    %v70 = vmul.f32 %v69, 5.656854
    %71 = vst.msk [vmem:[#allocation4 + $0xa] sm:$0x1] %vm20, %v70
    %s72 = sld [smem:[#allocation3 + $0xb]]
    %s73 = scalar_lea.vmem %s1, %s72
    %v74 = vld [vmem:[%s73] sm:$0x1]
    %v75 = vmul.f32 %v74, 5.656854
    %76 = vst.msk [vmem:[#allocation4 + $0xb] sm:$0x1] %vm20, %v75
    %s77 = sld [smem:[#allocation3 + $0xc]]
    %s78 = scalar_lea.vmem %s1, %s77
    %v79 = vld [vmem:[%s78] sm:$0x1]
    %v80 = vmul.f32 %v79, 5.656854
    %81 = vst.msk [vmem:[#allocation4 + $0xc] sm:$0x1] %vm20, %v80
    %s82 = sld [smem:[#allocation3 + $0xd]]
    %s83 = scalar_lea.vmem %s1, %s82
    %v84 = vld [vmem:[%s83] sm:$0x1]
    %v85 = vmul.f32 %v84, 5.656854
    %86 = vst.msk [vmem:[#allocation4 + $0xd] sm:$0x1] %vm20, %v85
    %s87 = sld [smem:[#allocation3 + $0xe]]
    %s88 = scalar_lea.vmem %s1, %s87
    %v89 = vld [vmem:[%s88] sm:$0x1]
    %v90 = vmul.f32 %v89, 5.656854
    %91 = vst.msk [vmem:[#allocation4 + $0xe] sm:$0x1] %vm20, %v90
    %s92 = sld [smem:[#allocation3 + $0xf]]
    %s93 = scalar_lea.vmem %s1, %s92
    %v94 = vld [vmem:[%s93] sm:$0x1]
    %v95 = vmul.f32 %v94, 5.656854
    %96 = vst.msk [vmem:[#allocation4 + $0xf] sm:$0x1] %vm20, %v95
    // Predicated region
    $region6: #{tpu_custom_call.1} parent=1 // pred_check
      _
    $region7: #{tpu_custom_call.1} parent=1 // pred_check_branch
      %98 = sbr.rel (0) target = $region9
    $region8: #{tpu_custom_call.1} parent=1 // pred_region
      %s100 = ssub.s32 256, 256
      %101 = vsyncadd [#allocation5], %s100
      %s102 = sshll.u32 [#allocation4], 4
      %s103 = int_to_ptr.vmem [resolvable:$true] %s102
      %108 = dma.vmem_to_hbm [thread:$0]  %s103, 256, %s2, [#allocation5], 128, 128, 8
    $region9: #{tpu_custom_call.1} parent=1 // pred_fallthru
      _
    // Predicated region
    $region10: #{tpu_custom_call.1} parent=1 // pred_check
      _
    $region11: #{tpu_custom_call.1} parent=1 // pred_check_branch
      %110 = sbr.rel (0) target = $region13
    $region12: #{tpu_custom_call.1} parent=1 // pred_region
      %111 = dma.done [#allocation5], 256
    $region13: #{tpu_custom_call.1} parent=1 // pred_fallthru
      _
    %112 = vsyncpa [#allocation5], 1

</llo_original>
